<compile_context>
chip_gen: v6e
topology: v6e:2x2x1
jax: 0.10.0
libtpu: 0.0.40
codegen_flags: <defaults>
</compile_context>

<pallas_src>
import functools

import jax
import jax.numpy as jnp
from jax.experimental import pallas as pl
from jax.experimental.pallas import tpu as pltpu


def _round_up(x, m):
    return -(-x // m) * m


def _joints_mse_kernel(*refs, tile_rows, rows, needs_mask, use_target_weight):
    if use_target_weight:
        pred_ref, gt_ref, w_ref, out_ref = refs
    else:
        pred_ref, gt_ref, out_ref = refs

    pred = pred_ref[...].astype(jnp.float32)        # (TR, HW)
    gt = gt_ref[...].astype(jnp.float32)            # (TR, HW)
    diff = pred - gt
    if use_target_weight:
        diff = diff * w_ref[...].astype(jnp.float32)  # (TR, 1) broadcasts over HW
    sq = diff * diff

    if needs_mask:
        # Only the ragged last tile has out-of-range rows; the where is a
        # single VPU select on a memory-bound kernel, so apply it uniformly.
        row0 = pl.program_id(0) * tile_rows
        rid = row0 + jax.lax.broadcasted_iota(jnp.int32, sq.shape, 0)
        sq = jnp.where(rid < rows, sq, jnp.float32(0.0))

    hw = sq.shape[1]
    # Reduce only over the sublane (row) axis; keep lanes dense.  The final
    # cross-lane / cross-tile reduction happens in the wrapper.
    out_ref[...] = jnp.sum(sq, axis=0, keepdims=True).reshape(1, 1, hw)


def _pick_tiling(rows, hw, dtype):
    """Choose (tile_rows, vmem_limit_bytes), generation-aware.

    tile_rows is a multiple of the dtype's sublane packing, sized so a single
    input tile fits the per-generation byte budget, and capped so the grid has
    several steps (dual-TC sharding on v7x) when the row count allows it.
    """
    itemsize = jnp.dtype(dtype).itemsize
    sublane = {4: 8, 2: 16, 1: 32}.get(itemsize, 8)

    try:
        vmem_cap = pltpu.get_tpu_info().vmem_capacity_bytes
    except Exception:
        vmem_cap = 64 * 1024 * 1024                  # conservative fallback

    if vmem_cap >= 100 * 1024 * 1024:                # v5e / v6e (128 MiB VMEM)
        budget = 12 * 1024 * 1024                    # per single input tile
        vmem_limit = 56 * 1024 * 1024
    else:                                            # v7x (64 MiB VMEM)
        budget = 10 * 1024 * 1024
        vmem_limit = 48 * 1024 * 1024
    # 2 streamed inputs x 2 pipeline buffers x budget stays under vmem_limit.

    max_tr = max(sublane, (budget // max(1, hw * itemsize)) // sublane * sublane)

    # Target several grid steps so the "parallel" axis shards across both
    # TensorCores on v7x; never force tiles smaller than one sublane group.
    if rows >= 4 * sublane:
        target_tiles = 4
    elif rows > sublane:
        target_tiles = 2
    else:
        target_tiles = 1
    cap = _round_up(pl.cdiv(rows, target_tiles), sublane)
    tr = max(sublane, min(max_tr, cap))
    return tr, vmem_limit


def joints_mse_loss(output, target, target_weight, use_target_weight=True):
    """output/target: (B, J, H, W); target_weight: (B, J, 1). Returns scalar f32."""
    B, J, H, W = output.shape
    HW = H * W
    rows = B * J

    # Contiguous reshapes only (no transpose -> no extra HBM copy).  Inputs
    # stay in their native dtype through HBM; cast to f32 inside the kernel.
    pred = output.reshape(rows, HW)
    gt = target.reshape(rows, HW)

    tr, vmem_limit = _pick_tiling(rows, HW, output.dtype)
    num_tiles = pl.cdiv(rows, tr)
    needs_mask = (num_tiles * tr != rows)

    kernel = functools.partial(
        _joints_mse_kernel,
        tile_rows=tr,
        rows=rows,
        needs_mask=needs_mask,
        use_target_weight=use_target_weight,
    )

    in_specs = [
        pl.BlockSpec((tr, HW), lambda i: (i, 0)),
        pl.BlockSpec((tr, HW), lambda i: (i, 0)),
    ]
    args = [pred, gt]
    if use_target_weight:
        tw = target_weight.reshape(rows, 1)
        in_specs.append(pl.BlockSpec((tr, 1), lambda i: (i, 0)))
        args.append(tw)
    # else: weight stream not passed at all (no dead DMA / VMEM buffer).

    partials = pl.pallas_call(
        kernel,
        out_shape=jax.ShapeDtypeStruct((num_tiles, 1, HW), jnp.float32),
        grid_spec=pltpu.PrefetchScalarGridSpec(
            num_scalar_prefetch=0,
            grid=(num_tiles,),
            in_specs=in_specs,
            out_specs=pl.BlockSpec((1, 1, HW), lambda i: (i, 0, 0)),
        ),
        compiler_params=pltpu.CompilerParams(
            dimension_semantics=("parallel",),        # dual-TC sharding on v7x
            vmem_limit_bytes=vmem_limit,
        ),
    )(*args)

    # loss = (1/J) * sum_j 0.5 * mean_{B*HW}(diff_j^2) = 0.5/(B*HW*J) * sum(diff^2)
    scale = jnp.float32(0.5 / (B * HW * J))
    return jnp.sum(partials) * scale


def joints_mse_loss_ref(output, target, target_weight, use_target_weight=True):
    """Pure-JAX reference mirroring the PyTorch loop semantics."""
    B, J, H, W = output.shape
    pred = output.reshape(B, J, H * W)
    gt = target.reshape(B, J, H * W)
    loss = jnp.float32(0.0)
    for idx in range(J):
        p = pred[:, idx, :]
        g = gt[:, idx, :]
        if use_target_weight:
            w = target_weight[:, idx]                # (B, 1)
            p = p * w
            g = g * w
        loss = loss + 0.5 * jnp.mean((p - g) ** 2)
    return loss / J


if __name__ == "__main__":
    key = jax.random.PRNGKey(0)
    k1, k2, k3 = jax.random.split(key, 3)

    B, J, H, W = 2, 4, 16, 16
    output = jax.random.normal(k1, (B, J, H, W), dtype=jnp.float32)
    target = jax.random.normal(k2, (B, J, H, W), dtype=jnp.float32)
    target_weight = jax.random.uniform(k3, (B, J, 1), dtype=jnp.float32)

    loss = joints_mse_loss(output, target, target_weight, use_target_weight=True)
    loss = jax.block_until_ready(loss)
    ref = joints_mse_loss_ref(output, target, target_weight, use_target_weight=True)
    assert jnp.allclose(loss, ref, rtol=1e-5, atol=1e-6), (loss, ref)

    # No-weight path (weight stream not passed to the kernel).
    loss_nw = jax.block_until_ready(
        joints_mse_loss(output, target, target_weight, use_target_weight=False))
    ref_nw = joints_mse_loss_ref(output, target, target_weight, use_target_weight=False)
    assert jnp.allclose(loss_nw, ref_nw, rtol=1e-5, atol=1e-6), (loss_nw, ref_nw)

    # Ragged-row path: B*J not a multiple of the tile rows -> in-kernel mask.
    B2, J2 = 3, 7                                    # rows = 21 (ragged, multi-tile)
    o2 = jax.random.normal(k1, (B2, J2, H, W), dtype=jnp.float32)
    t2 = jax.random.normal(k2, (B2, J2, H, W), dtype=jnp.float32)
    w2 = jax.random.uniform(k3, (B2, J2, 1), dtype=jnp.float32)
    loss_r = jax.block_until_ready(joints_mse_loss(o2, t2, w2, use_target_weight=True))
    ref_r = joints_mse_loss_ref(o2, t2, w2, use_target_weight=True)
    assert jnp.allclose(loss_r, ref_r, rtol=1e-5, atol=1e-6), (loss_r, ref_r)

    print("KERNEL_OK")
</pallas_src>

<mosaic_0001>
module attributes {stable_mosaic.version = 11 : i64} {
  func.func @_joints_mse_kernel(%arg0: i32, %arg1: memref<8x256xf32, #tpu.memory_space<vmem>>, %arg2: memref<8x256xf32, #tpu.memory_space<vmem>>, %arg3: memref<8x1xf32, #tpu.memory_space<vmem>>, %arg4: memref<1x1x256xf32, #tpu.memory_space<vmem>>) attributes {dimension_semantics = [#tpu.dimension_semantics<parallel>], iteration_bounds = array<i64: 1>, scalar_prefetch = 0 : i64, scratch_operands = 0 : i64, tpu.core_type = #tpu.core_type<tc>, window_params = [{transform_indices = @transform_0, window_bounds = array<i64: 8, 256>}, {transform_indices = @transform_1, window_bounds = array<i64: 8, 256>}, {transform_indices = @transform_2, window_bounds = array<i64: 8, 1>}, {transform_indices = @transform_3, window_bounds = array<i64: 1, 1, 256>}]} {
    %c0 = arith.constant 0 : index
    %c0_0 = arith.constant 0 : index
    %0 = vector.load %arg1[%c0, %c0_0] : memref<8x256xf32, #tpu.memory_space<vmem>>, vector<8x256xf32>
    %c0_1 = arith.constant 0 : index
    %c0_2 = arith.constant 0 : index
    %1 = vector.load %arg2[%c0_1, %c0_2] : memref<8x256xf32, #tpu.memory_space<vmem>>, vector<8x256xf32>
    %2 = arith.subf %0, %1 : vector<8x256xf32>
    %c0_3 = arith.constant 0 : index
    %c0_4 = arith.constant 0 : index
    %3 = vector.load %arg3[%c0_3, %c0_4] : memref<8x1xf32, #tpu.memory_space<vmem>>, vector<8x1xf32>
    %4 = vector.broadcast %3 : vector<8x1xf32> to vector<8x256xf32>
    %5 = arith.mulf %2, %4 : vector<8x256xf32>
    %6 = arith.mulf %5, %5 : vector<8x256xf32>
    %cst = arith.constant dense<0.000000e+00> : vector<256xf32>
    %7 = vector.multi_reduction <add>, %6, %cst [0] : vector<8x256xf32> to vector<256xf32>
    %8 = vector.shape_cast %7 : vector<256xf32> to vector<1x256xf32>
    %9 = vector.shape_cast %8 : vector<1x256xf32> to vector<1x1x256xf32>
    %c0_5 = arith.constant 0 : index
    %c0_6 = arith.constant 0 : index
    %c0_7 = arith.constant 0 : index
    %10 = vector.load %arg4[%c0_5, %c0_6, %c0_7] : memref<1x1x256xf32, #tpu.memory_space<vmem>>, vector<1x1x256xf32>
    tpu.vector_store %arg4[%c0_5, %c0_6, %c0_7], %9 {strides = array<i32>} : memref<1x1x256xf32, #tpu.memory_space<vmem>>, vector<1x1x256xf32>,
    return
  }
  func.func @transform_0(%arg0: i32) -> (i32, i32) {
    %c0_i32 = arith.constant 0 : i32
    %c0_i32_0 = arith.constant 0 : i32
    return %arg0, %c0_i32 : i32, i32
  }
  func.func @transform_1(%arg0: i32) -> (i32, i32) {
    %c0_i32 = arith.constant 0 : i32
    %c0_i32_0 = arith.constant 0 : i32
    return %arg0, %c0_i32 : i32, i32
  }
  func.func @transform_2(%arg0: i32) -> (i32, i32) {
    %c0_i32 = arith.constant 0 : i32
    %c0_i32_0 = arith.constant 0 : i32
    return %arg0, %c0_i32 : i32, i32
  }
  func.func @transform_3(%arg0: i32) -> (i32, i32, i32) {
    %c0_i32 = arith.constant 0 : i32
    %c0_i32_0 = arith.constant 0 : i32
    %c0_i32_1 = arith.constant 0 : i32
    return %arg0, %c0_i32, %c0_i32_0 : i32, i32, i32
  }
}

</mosaic_0001>

<llo_original>
// kernel: tpu_custom_call.1
$region0: #{tpu_custom_call.1}
  #allocation0 [shape = 'u32[]', space=smem, size = 0x4, offset = 0x4, fixed_abs, tag = 'smem constant byte address 0x4 - core index']
  #allocation1 [shape = 'u32[144,128]{1,0:T(1,128)}', space=vmem, size = 0x12000, scoped, tag = 'internal scratch']
  %s0 = inlined_call_operand.hbm [shape: f32[8,256], index: 0, kind: input, shape index: {}]
  %s1 = inlined_call_operand.hbm [shape: f32[8,256], index: 1, kind: input, shape index: {}]
  %s2 = inlined_call_operand.vmem [shape: f32[8,1], index: 2, kind: input, shape index: {}]
  %s3 = inlined_call_operand.hbm [shape: f32[1,1,256], index: 3, kind: output, shape index: {}]
  %s4 = sld [smem:[#allocation0]]
  $region30: #{tpu_custom_call.1} parent=0
    _
  %s6 = ssub.s32 1, %s4
  %s7 = scalar_select 0, %s6, %s4
  $region1: #{tpu_custom_call.1} parent=0
    #allocation2 [shape = 'u8[8192]{0}', space=vmem, size = 0x2000, scoped, tag = 'input window, operand 0, single buffered']
    #allocation3 [shape = 's32[1]{0}', space=sflag, size = 0x4, scoped, tag = 'scoped memory for tpu_custom_call.1']
    #allocation4 [shape = 's32[1]{0}', space=sflag, size = 0x4, scoped, tag = 'scoped memory for tpu_custom_call.1']
    #allocation5 [shape = 'u8[8192]{0}', space=vmem, size = 0x2000, scoped, tag = 'input window, operand 1, single buffered']
    #allocation6 [shape = 's32[1]{0}', space=sflag, size = 0x4, scoped, tag = 'scoped memory for tpu_custom_call.1']
    #allocation7 [shape = 'u8[1024]{0}', space=vmem, size = 0x400, scoped, tag = 'output window, operand 0, single buffered']
    %8 = vsyncpa [#allocation3], 0
    %9 = vsyncpa [#allocation6], 0
    %10 = vsyncpa [#allocation4], 0
    // Predicated region
    $region2: #{tpu_custom_call.1} parent=1 // pred_check
      _
    $region3: #{tpu_custom_call.1} parent=1 // pred_check_branch
      %12 = sbr.rel (0) target = $region5
    $region4: #{tpu_custom_call.1} parent=1 // pred_region
      %s14 = ssub.s32 256, 256
      %15 = vsyncadd [#allocation3], %s14
      %s17 = sshll.u32 [#allocation2], 4
      %s18 = int_to_ptr.vmem [resolvable:$true] %s17
      %20 = dma.hbm_to_vmem [thread:$0]  %s0, 256, %s18, [#allocation3]
    $region5: #{tpu_custom_call.1} parent=1 // pred_fallthru
      _
    // Predicated region
    $region6: #{tpu_custom_call.1} parent=1 // pred_check
      _
    $region7: #{tpu_custom_call.1} parent=1 // pred_check_branch
      %22 = sbr.rel (0) target = $region9
    $region8: #{tpu_custom_call.1} parent=1 // pred_region
      %s24 = ssub.s32 256, 256
      %25 = vsyncadd [#allocation6], %s24
      %s27 = sshll.u32 [#allocation5], 4
      %s28 = int_to_ptr.vmem [resolvable:$true] %s27
      %30 = dma.hbm_to_vmem [thread:$0]  %s1, 256, %s28, [#allocation6]
    $region9: #{tpu_custom_call.1} parent=1 // pred_fallthru
      _
    // Predicated region
    $region10: #{tpu_custom_call.1} parent=1 // pred_check
      _
    $region11: #{tpu_custom_call.1} parent=1 // pred_check_branch
      %32 = sbr.rel (0) target = $region13
    $region12: #{tpu_custom_call.1} parent=1 // pred_region
      _
    $region13: #{tpu_custom_call.1} parent=1 // pred_fallthru
      _
    // Predicated region
    $region14: #{tpu_custom_call.1} parent=1 // pred_check
      _
    $region15: #{tpu_custom_call.1} parent=1 // pred_check_branch
      %34 = sbr.rel (0) target = $region17
    $region16: #{tpu_custom_call.1} parent=1 // pred_region
      %35 = dma.done [#allocation3], 256
    $region17: #{tpu_custom_call.1} parent=1 // pred_fallthru
      _
    // Predicated region
    $region18: #{tpu_custom_call.1} parent=1 // pred_check
      _
    $region19: #{tpu_custom_call.1} parent=1 // pred_check_branch
      %37 = sbr.rel (0) target = $region21
    $region20: #{tpu_custom_call.1} parent=1 // pred_region
      %38 = dma.done [#allocation6], 256
    $region21: #{tpu_custom_call.1} parent=1 // pred_fallthru
      _
    %v39 = vld [vmem:[#allocation2] sm:$0xff]
    %v40 = vld [vmem:[#allocation2 + $0x8] sm:$0xff]
    %v41 = vld [vmem:[#allocation5] sm:$0xff]
    %v42 = vld [vmem:[#allocation5 + $0x8] sm:$0xff]
    %v43 = vsub.f32 %v39, %v41
    %v44 = vsub.f32 %v40, %v42
    %v45 = vld [vmem:[%s2] sm:$0xff]
    %47 = vset.pattern.permute.xlu0 0
    %48 = vperm.xlu0 %47, %v45
    %v49 = vpop.permute.xlu0 %48
    %v51 = vmul.f32 %v43, %v49
    %v52 = vmul.f32 %v44, %v49
    %v53 = vmul.f32 %v51, %v51
    %v54 = vmul.f32 %v52, %v52
    %v55 = vrot.slane %v53, 4
    %v56 = vadd.f32 %v53, %v55
    %v57 = vrot.slane %v56, 2
    %v58 = vadd.f32 %v56, %v57
    %v59 = vrot.slane %v58, 1
    %v60 = vadd.f32 %v58, %v59
    %v61 = vrot.slane %v54, 4
    %v62 = vadd.f32 %v54, %v61
    %v63 = vrot.slane %v62, 2
    %v64 = vadd.f32 %v62, %v63
    %v65 = vrot.slane %v64, 1
    %v66 = vadd.f32 %v64, %v65
    %v69 = vcombine.low %v60, %v66
    %v71 = vunpack.c.l.s4 1966171168
    %v72 = vunpack.c.0.s8 %v71
    %v73 = vlaneseq
    %v74 = vshrl.u32 %v73, 7
    %v75 = vsub.s32 %v72, %v74
    %v76 = vrot.slane %v69, %v75
    %v78 = vunpack.c.l.s4 1966171168
    %v79 = vunpack.c.0.s8 %v78
    %v80 = vlaneseq
    %v81 = vshrl.u32 %v80, 7
    %v82 = vsub.s32 %v79, %v81
    %v83 = vrot.slane %v76, %v82
    %v85 = vlaneseq
    %vm86 = vcmp.ge.s32.totalorder %v85, 0
    %vm87 = vcmp.lt.s32.totalorder %v85, 256
    %vm88 = vmand %vm86, %vm87
    %89 = vst.msk [vmem:[#allocation7] sm:$0x3] %vm88, %v83
    // Predicated region
    $region22: #{tpu_custom_call.1} parent=1 // pred_check
      _
    $region23: #{tpu_custom_call.1} parent=1 // pred_check_branch
      %91 = sbr.rel (0) target = $region25
    $region24: #{tpu_custom_call.1} parent=1 // pred_region
      %s93 = ssub.s32 32, 32
      %94 = vsyncadd [#allocation4], %s93
      %s96 = sshll.u32 [#allocation7], 4
      %s97 = int_to_ptr.vmem [resolvable:$true] %s96
      %99 = dma.vmem_to_hbm [thread:$0]  %s97, 32, %s3, [#allocation4]
    $region25: #{tpu_custom_call.1} parent=1 // pred_fallthru
      _
    // Predicated region
    $region26: #{tpu_custom_call.1} parent=1 // pred_check
      _
    $region27: #{tpu_custom_call.1} parent=1 // pred_check_branch
      %101 = sbr.rel (0) target = $region29
    $region28: #{tpu_custom_call.1} parent=1 // pred_region
      %102 = dma.done [#allocation4], 32
    $region29: #{tpu_custom_call.1} parent=1 // pred_fallthru
      _
    %103 = vsyncpa [#allocation3], 1
    %104 = vsyncpa [#allocation6], 1
    %105 = vsyncpa [#allocation4], 1

</llo_original>
